<compile_context>
chip_gen: v7x
topology: tpu7x:2x2x1
jax: 0.10.0
libtpu: 0.0.40
codegen_flags: <defaults>
</compile_context>

<pallas_src>
import functools

import jax
import jax.numpy as jnp
from jax import lax
from jax.experimental import pallas as pl
from jax.experimental.pallas import tpu as pltpu

# Problem-size constants implied by the PyTorch script
N_CHANNELS = 4
CENTRAL_RANGE = 16
D_OUT = N_CHANNELS * CENTRAL_RANGE          # 64
D_FUSED = 2 * D_OUT                         # 128  -> exactly one lane-dense vreg row
D_LATENT = 8
D_HIDDEN = 32
BATCH = 2

# Batch tile for large-batch deployments (multiple of 8 sublanes; 512 rows amortizes
# the ~0.35us per-grid-step overhead well). Small batches collapse to a single step.
MAX_TILE_B = 512


def _round_up(x, m):
    return ((x + m - 1) // m) * m


def _decoder_kernel(z_ref, w1_ref, b1_ref, w2_ref, b2_ref, out_ref):
    """One batch tile: z @ W1 + b1 -> ReLU -> @ W2 + b2, exp on upper D_OUT lanes."""
    z = z_ref[...]                                                        # (TILE_B, d_latent)
    h = jnp.dot(z, w1_ref[...], preferred_element_type=jnp.float32)      # (TILE_B, hidden)
    h = jnp.maximum(h + b1_ref[...], 0.0)                                 # bias + ReLU (VALU)
    out = jnp.dot(h, w2_ref[...], preferred_element_type=jnp.float32)    # (TILE_B, 128)
    out = out + b2_ref[...]
    # exp only the scale half (upper 64 lanes). EUP exp + VPU select ride in
    # otherwise-free slots; the single 128-lane store stays unmasked (vst, not vst.msk).
    lane = lax.broadcasted_iota(jnp.int32, out.shape, dimension=1)
    out_ref[...] = jnp.where(lane >= D_OUT, jnp.exp(out), out)


@functools.partial(jax.jit, static_argnames=())
def wvf_decoder_forward(z, params):
    """z: (B, ...) -> flattened to (B, d_latent). Returns (loc, scale) of the Normal."""
    b = z.shape[0]
    z2d = z.reshape(b, -1).astype(jnp.float32)
    w1, b1, w2, b2 = params

    # Pick a sublane-aligned batch tile; pad the batch so the grid divides evenly.
    tile_b = min(MAX_TILE_B, _round_up(b, 8))
    padded_b = _round_up(b, tile_b)
    if padded_b != b:
        z2d = jnp.pad(z2d, ((0, padded_b - b), (0, 0)))
    grid = (padded_b // tile_b,)

    fused = pl.pallas_call(
        _decoder_kernel,
        out_shape=jax.ShapeDtypeStruct((padded_b, D_FUSED), jnp.float32),
        grid_spec=pltpu.PrefetchScalarGridSpec(
            num_scalar_prefetch=0,
            grid=grid,
            in_specs=[
                # batch-tiled activations
                pl.BlockSpec((tile_b, D_LATENT), lambda i: (i, 0)),
                # weights / biases: constant index_map -> VMEM-resident across steps
                pl.BlockSpec((D_LATENT, D_HIDDEN), lambda i: (0, 0)),
                pl.BlockSpec((1, D_HIDDEN), lambda i: (0, 0)),
                pl.BlockSpec((D_HIDDEN, D_FUSED), lambda i: (0, 0)),
                pl.BlockSpec((1, D_FUSED), lambda i: (0, 0)),
            ],
            out_specs=pl.BlockSpec((tile_b, D_FUSED), lambda i: (i, 0)),
        ),
        compiler_params=pltpu.CompilerParams(
            # batch axis is embarrassingly parallel -> shard across TCs (v7x megacore)
            dimension_semantics=("parallel",),
        ),
    )(z2d, w1, b1, w2, b2)

    fused = fused[:b]                                   # drop batch padding
    loc = fused[:, :D_OUT].reshape(-1, 1, N_CHANNELS, CENTRAL_RANGE)
    scale = fused[:, D_OUT:].reshape(-1, 1, N_CHANNELS, CENTRAL_RANGE)
    return loc, scale


def init_params(key):
    """Deterministic synthetic init matching the decoder MLP shapes."""
    k1, k2, k3, k4 = jax.random.split(key, 4)
    w1 = jax.random.normal(k1, (D_LATENT, D_HIDDEN), jnp.float32) * 0.1
    b1 = jax.random.normal(k2, (1, D_HIDDEN), jnp.float32) * 0.01
    w2 = jax.random.normal(k3, (D_HIDDEN, D_FUSED), jnp.float32) * 0.1
    b2 = jax.random.normal(k4, (1, D_FUSED), jnp.float32) * 0.01
    return w1, b1, w2, b2


if __name__ == "__main__":
    key = jax.random.PRNGKey(0)
    kp, kz = jax.random.split(key)
    params = init_params(kp)
    # latent input; extra trailing dim exercises the .view(B, -1) flatten
    z = jax.random.normal(kz, (BATCH, D_LATENT, 1), jnp.float32)

    loc, scale = wvf_decoder_forward(z, params)
    jax.block_until_ready((loc, scale))

    assert loc.shape == (BATCH, 1, N_CHANNELS, CENTRAL_RANGE)
    assert scale.shape == (BATCH, 1, N_CHANNELS, CENTRAL_RANGE)
    assert bool(jnp.all(scale > 0))  # scale = exp(log_sig) must be positive

    # Reference check in plain JAX
    w1, b1, w2, b2 = params
    h_ref = jnp.maximum(z.reshape(BATCH, -1) @ w1 + b1, 0.0) @ w2 + b2
    loc_ref = h_ref[:, :D_OUT].reshape(-1, 1, N_CHANNELS, CENTRAL_RANGE)
    scale_ref = jnp.exp(h_ref[:, D_OUT:]).reshape(-1, 1, N_CHANNELS, CENTRAL_RANGE)
    assert jnp.allclose(loc, loc_ref, atol=1e-5)
    assert jnp.allclose(scale, scale_ref, atol=1e-5)

    # Larger-batch path exercises the batch grid (multiple grid steps, padding branch)
    zb = jax.random.normal(jax.random.PRNGKey(1), (2 * MAX_TILE_B + 3, D_LATENT), jnp.float32)
    loc_b, scale_b = wvf_decoder_forward(zb, params)
    jax.block_until_ready((loc_b, scale_b))
    h_b = jnp.maximum(zb @ w1 + b1, 0.0) @ w2 + b2
    assert jnp.allclose(loc_b.reshape(zb.shape[0], D_OUT), h_b[:, :D_OUT], atol=1e-5)
    assert jnp.allclose(scale_b.reshape(zb.shape[0], D_OUT), jnp.exp(h_b[:, D_OUT:]), atol=1e-5)

    # TODO(synk): torch.distributions.Normal itself has no Pallas/JAX-array equivalent;
    # we return (loc, scale) which fully parameterizes it.
    print("KERNEL_OK")
</pallas_src>

<mosaic_0001>
module attributes {stable_mosaic.version = 11 : i64} {
  func.func @_decoder_kernel(%arg0: i32, %arg1: memref<8x8xf32, #tpu.memory_space<vmem>>, %arg2: memref<8x32xf32, #tpu.memory_space<vmem>>, %arg3: memref<1x32xf32, #tpu.memory_space<vmem>>, %arg4: memref<32x128xf32, #tpu.memory_space<vmem>>, %arg5: memref<1x128xf32, #tpu.memory_space<vmem>>, %arg6: memref<8x128xf32, #tpu.memory_space<vmem>>) attributes {dimension_semantics = [#tpu.dimension_semantics<parallel>], iteration_bounds = array<i64: 1>, scalar_prefetch = 0 : i64, scratch_operands = 0 : i64, tpu.core_type = #tpu.core_type<tc>, window_params = [{transform_indices = @transform_0, window_bounds = array<i64: 8, 8>}, {pipeline_mode = #tpu.pipeline_mode<synchronous>, transform_indices = @transform_1, window_bounds = array<i64: 8, 32>}, {pipeline_mode = #tpu.pipeline_mode<synchronous>, transform_indices = @transform_2, window_bounds = array<i64: 1, 32>}, {pipeline_mode = #tpu.pipeline_mode<synchronous>, transform_indices = @transform_3, window_bounds = array<i64: 32, 128>}, {pipeline_mode = #tpu.pipeline_mode<synchronous>, transform_indices = @transform_4, window_bounds = array<i64: 1, 128>}, {transform_indices = @transform_5, window_bounds = array<i64: 8, 128>}]} {
    %c0 = arith.constant 0 : index
    %c0_0 = arith.constant 0 : index
    %0 = vector.load %arg1[%c0, %c0_0] : memref<8x8xf32, #tpu.memory_space<vmem>>, vector<8x8xf32>
    %c0_1 = arith.constant 0 : index
    %c0_2 = arith.constant 0 : index
    %1 = vector.load %arg2[%c0_1, %c0_2] : memref<8x32xf32, #tpu.memory_space<vmem>>, vector<8x32xf32>
    %cst = arith.constant dense<0.000000e+00> : vector<8x32xf32>
    %2 = tpu.matmul %0, %1, %cst {dimension_numbers = #tpu.dot_dimension_numbers<[1], [0], [0], [1], [0, 0, 1, 1], [], []>} : vector<8x8xf32>, vector<8x32xf32>, vector<8x32xf32> -> vector<8x32xf32>
    %c0_3 = arith.constant 0 : index
    %c0_4 = arith.constant 0 : index
    %3 = vector.load %arg3[%c0_3, %c0_4] : memref<1x32xf32, #tpu.memory_space<vmem>>, vector<1x32xf32>
    %4 = vector.broadcast %3 : vector<1x32xf32> to vector<8x32xf32>
    %5 = arith.addf %2, %4 : vector<8x32xf32>
    %cst_5 = arith.constant 0.000000e+00 : f32
    %6 = vector.broadcast %cst_5 : f32 to vector<8x32xf32>
    %7 = arith.maximumf %5, %6 : vector<8x32xf32>
    %c0_6 = arith.constant 0 : index
    %c0_7 = arith.constant 0 : index
    %8 = vector.load %arg4[%c0_6, %c0_7] : memref<32x128xf32, #tpu.memory_space<vmem>>, vector<32x128xf32>
    %cst_8 = arith.constant dense<0.000000e+00> : vector<8x128xf32>
    %9 = tpu.matmul %7, %8, %cst_8 {dimension_numbers = #tpu.dot_dimension_numbers<[1], [0], [0], [1], [0, 0, 1, 1], [], []>} : vector<8x32xf32>, vector<32x128xf32>, vector<8x128xf32> -> vector<8x128xf32>
    %c0_9 = arith.constant 0 : index
    %c0_10 = arith.constant 0 : index
    %10 = vector.load %arg5[%c0_9, %c0_10] : memref<1x128xf32, #tpu.memory_space<vmem>>, vector<1x128xf32>
    %11 = vector.broadcast %10 : vector<1x128xf32> to vector<8x128xf32>
    %12 = arith.addf %9, %11 : vector<8x128xf32>
    %13 = tpu.iota {dimensions = array<i32: 1>} : vector<8x128xi32>
    %c64_i32 = arith.constant 64 : i32
    %14 = vector.broadcast %c64_i32 : i32 to vector<8x128xi32>
    %15 = arith.cmpi sge, %13, %14 : vector<8x128xi32>
    %16 = math.exp %12 : vector<8x128xf32>
    %17 = arith.select %15, %16, %12 : vector<8x128xi1>, vector<8x128xf32>
    %c0_11 = arith.constant 0 : index
    %c0_12 = arith.constant 0 : index
    %18 = vector.load %arg6[%c0_11, %c0_12] : memref<8x128xf32, #tpu.memory_space<vmem>>, vector<8x128xf32>
    tpu.vector_store %arg6[%c0_11, %c0_12], %17 {strides = array<i32>} : memref<8x128xf32, #tpu.memory_space<vmem>>, vector<8x128xf32>,
    return
  }
  func.func @transform_0(%arg0: i32) -> (i32, i32) {
    %c0_i32 = arith.constant 0 : i32
    %c0_i32_0 = arith.constant 0 : i32
    return %arg0, %c0_i32 : i32, i32
  }
  func.func @transform_1(%arg0: i32) -> (i32, i32) {
    %c0_i32 = arith.constant 0 : i32
    %c0_i32_0 = arith.constant 0 : i32
    %c0_i32_1 = arith.constant 0 : i32
    return %c0_i32, %c0_i32_0 : i32, i32
  }
  func.func @transform_2(%arg0: i32) -> (i32, i32) {
    %c0_i32 = arith.constant 0 : i32
    %c0_i32_0 = arith.constant 0 : i32
    %c0_i32_1 = arith.constant 0 : i32
    return %c0_i32, %c0_i32_0 : i32, i32
  }
  func.func @transform_3(%arg0: i32) -> (i32, i32) {
    %c0_i32 = arith.constant 0 : i32
    %c0_i32_0 = arith.constant 0 : i32
    %c0_i32_1 = arith.constant 0 : i32
    return %c0_i32, %c0_i32_0 : i32, i32
  }
  func.func @transform_4(%arg0: i32) -> (i32, i32) {
    %c0_i32 = arith.constant 0 : i32
    %c0_i32_0 = arith.constant 0 : i32
    %c0_i32_1 = arith.constant 0 : i32
    return %c0_i32, %c0_i32_0 : i32, i32
  }
  func.func @transform_5(%arg0: i32) -> (i32, i32) {
    %c0_i32 = arith.constant 0 : i32
    %c0_i32_0 = arith.constant 0 : i32
    return %arg0, %c0_i32 : i32, i32
  }
}

</mosaic_0001>

<llo_original>
// kernel: wvf_decoder_forward.1
$region0: #{wvf_decoder_forward.1}
  #allocation0 [shape = 'u32[]', space=smem, size = 0x4, offset = 0x4, fixed_abs, tag = 'smem constant byte address 0x4 - core index']
  #allocation1 [shape = 'u32[144,128]{1,0:T(1,128)}', space=vmem, size = 0x12000, scoped, tag = 'internal scratch']
  %s0 = inlined_call_operand.vmem [shape: f32[8,8], index: 0, kind: input, shape index: {}]
  %s1 = inlined_call_operand.vmem [shape: f32[8,32], index: 1, kind: input, shape index: {}]
  %s2 = inlined_call_operand.vmem [shape: f32[1,32], index: 2, kind: input, shape index: {}]
  %s3 = inlined_call_operand.hbm [shape: f32[32,128], index: 3, kind: input, shape index: {}]
  %s4 = inlined_call_operand.vmem [shape: f32[1,128], index: 4, kind: input, shape index: {}]
  %s5 = inlined_call_operand.vmem [shape: f32[8,128], index: 5, kind: output, shape index: {}]
  %s6 = sld [smem:[#allocation0]]
  $region34: #{wvf_decoder_forward.1} parent=0
    _
  %s8 = ssub.s32 1, %s6
  %s9 = scalar_select 0, %s8, %s6
  $region1: #{wvf_decoder_forward.1} parent=0
    #allocation2 [shape = 'u8[16384]{0}', space=vmem, size = 0x4000, scoped, tag = 'input window, operand 3, single buffered']
    #allocation3 [shape = 's32[1]{0}', space=sflag, size = 0x4, scoped, tag = 'scoped memory for wvf_decoder_forward.1']
    %10 = vsyncpa [#allocation3], 0
    // Predicated region
    $region2: #{wvf_decoder_forward.1} parent=1 // pred_check
      _
    $region3: #{wvf_decoder_forward.1} parent=1 // pred_check_branch
      %12 = sbr.rel (0) target = $region5
    $region4: #{wvf_decoder_forward.1} parent=1 // pred_region
      _
    $region5: #{wvf_decoder_forward.1} parent=1 // pred_fallthru
      _
    // Predicated region
    $region6: #{wvf_decoder_forward.1} parent=1 // pred_check
      _
    $region7: #{wvf_decoder_forward.1} parent=1 // pred_check_branch
      %14 = sbr.rel (0) target = $region9
    $region8: #{wvf_decoder_forward.1} parent=1 // pred_region
      _
    $region9: #{wvf_decoder_forward.1} parent=1 // pred_fallthru
      _
    // Predicated region
    $region10: #{wvf_decoder_forward.1} parent=1 // pred_check
      _
    $region11: #{wvf_decoder_forward.1} parent=1 // pred_check_branch
      %16 = sbr.rel (0) target = $region13
    $region12: #{wvf_decoder_forward.1} parent=1 // pred_region
      _
    $region13: #{wvf_decoder_forward.1} parent=1 // pred_fallthru
      _
    // Predicated region
    $region14: #{wvf_decoder_forward.1} parent=1 // pred_check
      _
    $region15: #{wvf_decoder_forward.1} parent=1 // pred_check_branch
      %18 = sbr.rel (0) target = $region17
    $region16: #{wvf_decoder_forward.1} parent=1 // pred_region
      %s20 = ssub.s32 512, 512
      %21 = vsyncadd [#allocation3], %s20
      %s22 = sshll.u32 [#allocation2], 4
      %s23 = int_to_ptr.vmem [resolvable:$true] %s22
      %28 = dma.hbm_to_vmem [thread:$0]  %s3, 512, %s23, [#allocation3], 128, 128, 8
    $region17: #{wvf_decoder_forward.1} parent=1 // pred_fallthru
      _
    // Predicated region
    $region18: #{wvf_decoder_forward.1} parent=1 // pred_check
      _
    $region19: #{wvf_decoder_forward.1} parent=1 // pred_check_branch
      %30 = sbr.rel (0) target = $region21
    $region20: #{wvf_decoder_forward.1} parent=1 // pred_region
      _
    $region21: #{wvf_decoder_forward.1} parent=1 // pred_fallthru
      _
    // Predicated region
    $region22: #{wvf_decoder_forward.1} parent=1 // pred_check
      _
    $region23: #{wvf_decoder_forward.1} parent=1 // pred_check_branch
      %32 = sbr.rel (0) target = $region25
    $region24: #{wvf_decoder_forward.1} parent=1 // pred_region
      %33 = dma.done [#allocation3], 512
    $region25: #{wvf_decoder_forward.1} parent=1 // pred_fallthru
      _
    %v34 = vld [vmem:[%s0] sm:$0xff]
    %v35 = vld [vmem:[%s1] sm:$0xff]
    %v36 = vld [vmem:[%s2] sm:$0x1]
    %v38 = vlaneseq
    %v39 = vshrl.u32 %v38, 7
    %v40 = vsub.s32 0, %v39
    %v41 = vrot.slane %v36, %v40
    %vm43 = vcmask 64512
    %v45 = vsel %vm43, %v34, 0
    %47 = vmatprep.subr.mxu0 0.0
    %48 = vmatpush1.msra.mxu0 %v35
    %49 = vmatprep.subr.mxu0 0.0
    %50 = vmatpush1.msra.mxu0 0.0
    %51 = vmatprep.subr.mxu0 0.0
    %52 = vmatpush1.msra.mxu0 0.0
    %53 = vmatprep.subr.mxu0 0.0
    %54 = vmatpush1.msra.mxu0 0.0
    %55 = vmatprep.subr.mxu0 0.0
    %56 = vmatpush1.msra.mxu0 0.0
    %57 = vmatprep.subr.mxu0 0.0
    %58 = vmatpush1.msra.mxu0 0.0
    %59 = vmatprep.subr.mxu0 0.0
    %60 = vmatpush1.msra.mxu0 0.0
    %61 = vmatprep.subr.mxu0 0.0
    %62 = vmatpush1.msra.mxu0 0.0
    %63 = vmatprep.subr.mxu0 0.0
    %64 = vmatpush1.msra.mxu0 0.0
    %65 = vmatprep.subr.mxu0 0.0
    %66 = vmatpush1.msra.mxu0 0.0
    %67 = vmatprep.subr.mxu0 0.0
    %68 = vmatpush1.msra.mxu0 0.0
    %69 = vmatprep.subr.mxu0 0.0
    %70 = vmatpush1.msra.mxu0 0.0
    %71 = vmatprep.subr.mxu0 0.0
    %72 = vmatpush1.msra.mxu0 0.0
    %73 = vmatprep.subr.mxu0 0.0
    %74 = vmatpush1.msra.mxu0 0.0
    %75 = vmatprep.subr.mxu0 0.0
    %76 = vmatpush1.msra.mxu0 0.0
    %77 = vmatprep.subr.mxu0 0.0
    %78 = vmatpush1.msra.mxu0 0.0
    %79 = vmatprep.subr.mxu0 0.0
    %80 = vmatpush1.msra.mxu0 0.0
    %81 = vmatprep.subr.mxu0 0.0
    %82 = vmatpush1.msra.mxu0 0.0
    %83 = vmatprep.subr.mxu0 0.0
    %84 = vmatpush1.msra.mxu0 0.0
    %85 = vmatprep.subr.mxu0 0.0
    %86 = vmatpush1.msra.mxu0 0.0
    %87 = vmatprep.subr.mxu0 0.0
    %88 = vmatpush1.msra.mxu0 0.0
    %89 = vmatprep.subr.mxu0 0.0
    %90 = vmatpush1.msra.mxu0 0.0
    %91 = vmatprep.subr.mxu0 0.0
    %92 = vmatpush1.msra.mxu0 0.0
    %93 = vmatprep.subr.mxu0 0.0
    %94 = vmatpush1.msra.mxu0 0.0
    %95 = vmatprep.subr.mxu0 0.0
    %96 = vmatpush1.msra.mxu0 0.0
    %97 = vmatprep.subr.mxu0 0.0
    %98 = vmatpush1.msra.mxu0 0.0
    %99 = vmatprep.subr.mxu0 0.0
    %100 = vmatpush1.msra.mxu0 0.0
    %101 = vmatprep.subr.mxu0 0.0
    %102 = vmatpush1.msra.mxu0 0.0
    %103 = vmatprep.subr.mxu0 0.0
    %104 = vmatpush1.msra.mxu0 0.0
    %105 = vmatprep.subr.mxu0 0.0
    %106 = vmatpush1.msra.mxu0 0.0
    %107 = vmatprep.subr.mxu0 0.0
    %108 = vmatpush1.msra.mxu0 0.0
    %109 = vmatprep.subr.mxu0 0.0
    %110 = vmatpush1.msra.mxu0 0.0
    %111 = vmatprep.mubr.f32.mxu0 0.0
    %112 = vmatmul.mubr.f32.gmra.mrb[0].mxu0 %v45
    %v113 = vpop.f32.mrb[0].mxu0
    %v114 = vadd.f32 %v41, %v113
    %v115 = vpop.f32.mrb[0].mxu0
    %116 = vdwg.mxu0
    %v117 = vmax.f32 %v114, 0.0
    %v118 = vld [vmem:[#allocation2] sm:$0xff]
    %v119 = vld [vmem:[#allocation2 + $0x8] sm:$0xff]
    %v120 = vld [vmem:[#allocation2 + $0x10] sm:$0xff]
    %v121 = vld [vmem:[#allocation2 + $0x18] sm:$0xff]
    %v122 = vld [vmem:[%s4] sm:$0x1]
    %v124 = vlaneseq
    %v125 = vshrl.u32 %v124, 7
    %v126 = vsub.s32 0, %v125
    %v127 = vrot.slane %v122, %v126
    %vm129 = vcmask 261120
    %v131 = vsel %vm129, %v117, 0
    %133 = vmatprep.subr.mxu0 0.0
    %134 = vmatpush1.msra.mxu0 %v118
    %135 = vmatprep.subr.mxu0 0.0
    %136 = vmatpush1.msra.mxu0 %v119
    %137 = vmatprep.subr.mxu0 0.0
    %138 = vmatpush1.msra.mxu0 %v120
    %139 = vmatprep.subr.mxu0 0.0
    %140 = vmatpush1.msra.mxu0 %v121
    %141 = vmatprep.subr.mxu0 0.0
    %142 = vmatpush1.msra.mxu0 0.0
    %143 = vmatprep.subr.mxu0 0.0
    %144 = vmatpush1.msra.mxu0 0.0
    %145 = vmatprep.subr.mxu0 0.0
    %146 = vmatpush1.msra.mxu0 0.0
    %147 = vmatprep.subr.mxu0 0.0
    %148 = vmatpush1.msra.mxu0 0.0
    %149 = vmatprep.subr.mxu0 0.0
    %150 = vmatpush1.msra.mxu0 0.0
    %151 = vmatprep.subr.mxu0 0.0
    %152 = vmatpush1.msra.mxu0 0.0
    %153 = vmatprep.subr.mxu0 0.0
    %154 = vmatpush1.msra.mxu0 0.0
    %155 = vmatprep.subr.mxu0 0.0
    %156 = vmatpush1.msra.mxu0 0.0
    %157 = vmatprep.subr.mxu0 0.0
    %158 = vmatpush1.msra.mxu0 0.0
    %159 = vmatprep.subr.mxu0 0.0
    %160 = vmatpush1.msra.mxu0 0.0
    %161 = vmatprep.subr.mxu0 0.0
    %162 = vmatpush1.msra.mxu0 0.0
    %163 = vmatprep.subr.mxu0 0.0
    %164 = vmatpush1.msra.mxu0 0.0
    %165 = vmatprep.subr.mxu0 0.0
    %166 = vmatpush1.msra.mxu0 0.0
    %167 = vmatprep.subr.mxu0 0.0
    %168 = vmatpush1.msra.mxu0 0.0
    %169 = vmatprep.subr.mxu0 0.0
    %170 = vmatpush1.msra.mxu0 0.0
    %171 = vmatprep.subr.mxu0 0.0
    %172 = vmatpush1.msra.mxu0 0.0
    %173 = vmatprep.subr.mxu0 0.0
    %174 = vmatpush1.msra.mxu0 0.0
    %175 = vmatprep.subr.mxu0 0.0
    %176 = vmatpush1.msra.mxu0 0.0
    %177 = vmatprep.subr.mxu0 0.0
    %178 = vmatpush1.msra.mxu0 0.0
    %179 = vmatprep.subr.mxu0 0.0
    %180 = vmatpush1.msra.mxu0 0.0
    %181 = vmatprep.subr.mxu0 0.0
    %182 = vmatpush1.msra.mxu0 0.0
    %183 = vmatprep.subr.mxu0 0.0
    %184 = vmatpush1.msra.mxu0 0.0
    %185 = vmatprep.subr.mxu0 0.0
    %186 = vmatpush1.msra.mxu0 0.0
    %187 = vmatprep.subr.mxu0 0.0
    %188 = vmatpush1.msra.mxu0 0.0
    %189 = vmatprep.subr.mxu0 0.0
    %190 = vmatpush1.msra.mxu0 0.0
    %191 = vmatprep.subr.mxu0 0.0
    %192 = vmatpush1.msra.mxu0 0.0
    %193 = vmatprep.subr.mxu0 0.0
    %194 = vmatpush1.msra.mxu0 0.0
    %195 = vmatprep.subr.mxu0 0.0
    %196 = vmatpush1.msra.mxu0 0.0
    %197 = vmatprep.mubr.f32.mxu0 0.0
    %198 = vmatmul.mubr.f32.gmra.mrb[0].mxu0 %v131
    %v199 = vpop.f32.mrb[0].mxu0
    %v200 = vadd.f32 %v127, %v199
    %v201 = vpop.f32.mrb[0].mxu0
    %202 = vdwg.mxu0
    %v203 = vlaneseq
    %v204 = vand.u32 %v203, 127
    %vm205 = vcmp.ge.s32.totalorder %v204, 64
    %v206 = vmul.f32 %v200, 1.442695
    %v207 = vpow.pop %v206
    %v208 = vsel %vm205, %v207, %v200
    %209 = vst [vmem:[%s5] sm:$0xff] %v208
    // Predicated region
    $region26: #{wvf_decoder_forward.1} parent=1 // pred_check
      _
    $region27: #{wvf_decoder_forward.1} parent=1 // pred_check_branch
      %211 = sbr.rel (0) target = $region29
    $region28: #{wvf_decoder_forward.1} parent=1 // pred_region
      _
    $region29: #{wvf_decoder_forward.1} parent=1 // pred_fallthru
      _
    // Predicated region
    $region30: #{wvf_decoder_forward.1} parent=1 // pred_check
      _
    $region31: #{wvf_decoder_forward.1} parent=1 // pred_check_branch
      %213 = sbr.rel (0) target = $region33
    $region32: #{wvf_decoder_forward.1} parent=1 // pred_region
      _
    $region33: #{wvf_decoder_forward.1} parent=1 // pred_fallthru
      _
    %214 = vsyncpa [#allocation3], 1

</llo_original>
